<compile_context>
chip_gen: v7x
topology: tpu7x:2x2x1
jax: 0.10.0
libtpu: 0.0.40
codegen_flags: <defaults>
</compile_context>

<pallas_src>
import functools
import math

import jax
import jax.numpy as jnp
from jax.experimental import pallas as pl
from jax.experimental.pallas import tpu as pltpu


def _relpos_kernel(ri_row_ref, ri_col_ref, w_ref, out_ref, *, relpos_k, no_bins):
    # ri_row_ref : (1, TILE_I, 1)   residue indices for this row tile
    # ri_col_ref : (1, 1, L)        residue indices for this column tile, each
    #                               repeated c_z times (lane-dense (j, c) layout)
    # w_ref      : (no_bins, L)     (W[b, :] + bias) tiled TILE_J times
    # out_ref    : (1, TILE_I, L)   L = TILE_J * c_z
    tile_i = ri_row_ref.shape[1]
    L = ri_col_ref.shape[2]

    ri_i = ri_row_ref[0, :, :].astype(jnp.float32)        # (TILE_I, 1)
    ri_j = ri_col_ref[0, :, :].astype(jnp.float32)        # (1, L)
    d = ri_i - ri_j                                       # (TILE_I, L)

    # Staircase select over the 2k+1 consecutive integer boundaries.
    # Nearest-boundary binning with ties broken toward the lower index is
    # exactly: bin >= b  <=>  d > (b - k) - 0.5  (strict), for b = 1..2k.
    acc = jnp.broadcast_to(w_ref[pl.ds(0, 1), :], (tile_i, L))
    for b in range(1, no_bins):
        threshold = float(b - relpos_k) - 0.5
        wb = w_ref[pl.ds(b, 1), :]                        # (1, L)
        acc = jnp.where(d > threshold, wb, acc)

    out_ref[0] = acc.astype(out_ref.dtype)


def _pick_tile(n, limit, quantum):
    """Largest t dividing n with t <= limit and t % quantum == 0; else n (full dim)."""
    if n <= limit:
        return n
    for t in range(limit, 0, -1):
        if n % t == 0 and t % quantum == 0:
            return t
    return n


def relative_position_encoding(ri, weight_t, bias, relpos_k, *,
                               out_dtype=None, tile_i=None, tile_j=None):
    """ri: [B, N] (float or int); weight_t: [no_bins, c_z]; bias: [c_z]
    -> [B, N, N, c_z] in `out_dtype` (default: weight dtype)."""
    B, N = ri.shape
    no_bins, c_z = weight_t.shape
    assert no_bins == 2 * relpos_k + 1
    out_dtype = jnp.dtype(out_dtype if out_dtype is not None else weight_t.dtype)

    if tile_i is None:
        tile_i = _pick_tile(N, 256, 8)                        # sublane tile
    if tile_j is None:
        lane_quantum = 128 // math.gcd(c_z, 128)              # TILE_J*c_z % 128 == 0
        tile_j = _pick_tile(N, max(1, 2048 // c_z), lane_quantum)
    assert N % tile_i == 0 and N % tile_j == 0
    L = tile_j * c_z

    rif = ri.astype(jnp.float32)
    ri_rows = rif[:, :, None]                                 # (B, N, 1)
    ri_cols = jnp.repeat(rif, c_z, axis=-1)[:, None, :]       # (B, 1, N*c_z)
    w_fused = weight_t.astype(jnp.float32) + bias.astype(jnp.float32)[None, :]
    w_tiled = jnp.tile(w_fused, (1, tile_j))                  # (no_bins, L), resident

    out_block_bytes = tile_i * L * out_dtype.itemsize
    vmem_limit = int(min(max(6 * out_block_bytes, 16 * 1024 * 1024),
                         48 * 1024 * 1024))

    kernel = functools.partial(_relpos_kernel, relpos_k=relpos_k, no_bins=no_bins)

    out_flat = pl.pallas_call(
        kernel,
        out_shape=jax.ShapeDtypeStruct((B, N, N * c_z), out_dtype),
        grid_spec=pltpu.PrefetchScalarGridSpec(
            num_scalar_prefetch=0,
            grid=(B, N // tile_i, N // tile_j),
            in_specs=[
                pl.BlockSpec((1, tile_i, 1), lambda b, i, j: (b, i, 0)),   # row ri
                pl.BlockSpec((1, 1, L), lambda b, i, j: (b, 0, j)),        # col ri (expanded)
                pl.BlockSpec((no_bins, L), lambda b, i, j: (0, 0)),        # W+bias (resident)
            ],
            out_specs=pl.BlockSpec((1, tile_i, L), lambda b, i, j: (b, i, j)),
        ),
        compiler_params=pltpu.CompilerParams(
            dimension_semantics=("parallel", "parallel", "parallel"),
            vmem_limit_bytes=vmem_limit,
        ),
    )(ri_rows, ri_cols, w_tiled)

    return out_flat.reshape(B, N, N, c_z)


def _reference(ri, weight_t, bias, relpos_k):
    """Pure-JAX transcription of the torch forward, for verification."""
    ri = ri.astype(jnp.float32)
    d = ri[..., None] - ri[..., None, :]
    boundaries = jnp.arange(-relpos_k, relpos_k + 1, dtype=jnp.float32)
    idx = jnp.argmin(jnp.abs(d[..., None] - boundaries), axis=-1)
    oh = jax.nn.one_hot(idx, 2 * relpos_k + 1, dtype=jnp.float32)
    return jnp.einsum("...b,bc->...c", oh, weight_t) + bias


if __name__ == "__main__":
    # Small shapes consistent with the module: batch=2, N=16 residues,
    # relpos_k=3 -> no_bins=7, c_z=32 pair channels.
    B, N = 2, 16
    relpos_k = 3
    no_bins = 2 * relpos_k + 1
    c_z = 32

    key = jax.random.PRNGKey(0)
    k_ri, k_w, k_b = jax.random.split(key, 3)

    # Integer-valued residue indices (like torch "residue_index" feats).
    ri = jax.random.randint(k_ri, (B, N), minval=0, maxval=64).astype(jnp.float32)

    # Deterministic Linear params (torch Linear: weight [c_z, no_bins], bias [c_z]).
    bound = 1.0 / jnp.sqrt(float(no_bins))
    w_torch_layout = jax.random.uniform(
        k_w, (c_z, no_bins), minval=-bound, maxval=bound, dtype=jnp.float32)
    bias = jax.random.uniform(
        k_b, (c_z,), minval=-bound, maxval=bound, dtype=jnp.float32)
    weight_t = w_torch_layout.T  # [no_bins, c_z] for the kernel

    out = relative_position_encoding(ri, weight_t, bias, relpos_k)
    out = jax.block_until_ready(out)

    ref = _reference(ri, weight_t, bias, relpos_k)
    assert out.shape == (B, N, N, c_z), out.shape
    assert out.dtype == jnp.float32, out.dtype
    assert jnp.allclose(out, ref, atol=1e-5, rtol=1e-5), "mismatch vs reference"

    # Integer residue_index input must still produce float output (dtype follows
    # the Linear parameters, not ri).
    out_int = relative_position_encoding(ri.astype(jnp.int32), weight_t, bias, relpos_k)
    out_int = jax.block_until_ready(out_int)
    assert out_int.dtype == jnp.float32, out_int.dtype
    assert jnp.allclose(out_int, ref, atol=1e-5, rtol=1e-5), "mismatch (int ri)"

    print("KERNEL_OK")
</pallas_src>

<mosaic_0001>
module attributes {stable_mosaic.version = 11 : i64} {
  func.func @_relpos_kernel(%arg0: i32, %arg1: i32, %arg2: i32, %arg3: memref<1x16x1xf32, #tpu.memory_space<vmem>>, %arg4: memref<1x1x512xf32, #tpu.memory_space<vmem>>, %arg5: memref<7x512xf32, #tpu.memory_space<vmem>>, %arg6: memref<1x16x512xf32, #tpu.memory_space<vmem>>) attributes {dimension_semantics = [#tpu.dimension_semantics<parallel>, #tpu.dimension_semantics<parallel>, #tpu.dimension_semantics<parallel>], iteration_bounds = array<i64: 2, 1, 1>, scalar_prefetch = 0 : i64, scratch_operands = 0 : i64, tpu.core_type = #tpu.core_type<tc>, window_params = [{transform_indices = @transform_0, window_bounds = array<i64: 1, 16, 1>}, {transform_indices = @transform_1, window_bounds = array<i64: 1, 1, 512>}, {pipeline_mode = #tpu.pipeline_mode<synchronous>, transform_indices = @transform_2, window_bounds = array<i64: 7, 512>}, {transform_indices = @transform_3, window_bounds = array<i64: 1, 16, 512>}]} {
    %c0 = arith.constant 0 : index
    %c0_0 = arith.constant 0 : index
    %c0_1 = arith.constant 0 : index
    %0 = vector.load %arg3[%c0, %c0_0, %c0_1] : memref<1x16x1xf32, #tpu.memory_space<vmem>>, vector<1x16x1xf32>
    %1 = vector.shape_cast %0 : vector<1x16x1xf32> to vector<16x1xf32>
    %c0_2 = arith.constant 0 : index
    %c0_3 = arith.constant 0 : index
    %c0_4 = arith.constant 0 : index
    %2 = vector.load %arg4[%c0_2, %c0_3, %c0_4] : memref<1x1x512xf32, #tpu.memory_space<vmem>>, vector<1x1x512xf32>
    %3 = vector.shape_cast %2 : vector<1x1x512xf32> to vector<1x512xf32>
    %4 = vector.broadcast %1 : vector<16x1xf32> to vector<16x512xf32>
    %5 = vector.broadcast %3 : vector<1x512xf32> to vector<16x512xf32>
    %6 = arith.subf %4, %5 : vector<16x512xf32>
    %c0_5 = arith.constant 0 : index
    %c0_6 = arith.constant 0 : index
    %7 = vector.load %arg5[%c0_5, %c0_6] : memref<7x512xf32, #tpu.memory_space<vmem>>, vector<1x512xf32>
    %8 = vector.shape_cast %7 : vector<1x512xf32> to vector<1x512xf32>
    %9 = vector.broadcast %8 : vector<1x512xf32> to vector<16x512xf32>
    %c1 = arith.constant 1 : index
    %c0_7 = arith.constant 0 : index
    %10 = vector.load %arg5[%c1, %c0_7] : memref<7x512xf32, #tpu.memory_space<vmem>>, vector<1x512xf32>
    %cst = arith.constant -2.500000e+00 : f32
    %11 = vector.broadcast %cst : f32 to vector<16x512xf32>
    %12 = arith.cmpf ogt, %6, %11 : vector<16x512xf32>
    %13 = vector.shape_cast %10 : vector<1x512xf32> to vector<1x512xf32>
    %14 = vector.broadcast %13 : vector<1x512xf32> to vector<16x512xf32>
    %15 = arith.select %12, %14, %9 : vector<16x512xi1>, vector<16x512xf32>
    %c2 = arith.constant 2 : index
    %c0_8 = arith.constant 0 : index
    %16 = vector.load %arg5[%c2, %c0_8] : memref<7x512xf32, #tpu.memory_space<vmem>>, vector<1x512xf32>
    %cst_9 = arith.constant -1.500000e+00 : f32
    %17 = vector.broadcast %cst_9 : f32 to vector<16x512xf32>
    %18 = arith.cmpf ogt, %6, %17 : vector<16x512xf32>
    %19 = vector.shape_cast %16 : vector<1x512xf32> to vector<1x512xf32>
    %20 = vector.broadcast %19 : vector<1x512xf32> to vector<16x512xf32>
    %21 = arith.select %18, %20, %15 : vector<16x512xi1>, vector<16x512xf32>
    %c3 = arith.constant 3 : index
    %c0_10 = arith.constant 0 : index
    %22 = vector.load %arg5[%c3, %c0_10] : memref<7x512xf32, #tpu.memory_space<vmem>>, vector<1x512xf32>
    %cst_11 = arith.constant -5.000000e-01 : f32
    %23 = vector.broadcast %cst_11 : f32 to vector<16x512xf32>
    %24 = arith.cmpf ogt, %6, %23 : vector<16x512xf32>
    %25 = vector.shape_cast %22 : vector<1x512xf32> to vector<1x512xf32>
    %26 = vector.broadcast %25 : vector<1x512xf32> to vector<16x512xf32>
    %27 = arith.select %24, %26, %21 : vector<16x512xi1>, vector<16x512xf32>
    %c4 = arith.constant 4 : index
    %c0_12 = arith.constant 0 : index
    %28 = vector.load %arg5[%c4, %c0_12] : memref<7x512xf32, #tpu.memory_space<vmem>>, vector<1x512xf32>
    %cst_13 = arith.constant 5.000000e-01 : f32
    %29 = vector.broadcast %cst_13 : f32 to vector<16x512xf32>
    %30 = arith.cmpf ogt, %6, %29 : vector<16x512xf32>
    %31 = vector.shape_cast %28 : vector<1x512xf32> to vector<1x512xf32>
    %32 = vector.broadcast %31 : vector<1x512xf32> to vector<16x512xf32>
    %33 = arith.select %30, %32, %27 : vector<16x512xi1>, vector<16x512xf32>
    %c5 = arith.constant 5 : index
    %c0_14 = arith.constant 0 : index
    %34 = vector.load %arg5[%c5, %c0_14] : memref<7x512xf32, #tpu.memory_space<vmem>>, vector<1x512xf32>
    %cst_15 = arith.constant 1.500000e+00 : f32
    %35 = vector.broadcast %cst_15 : f32 to vector<16x512xf32>
    %36 = arith.cmpf ogt, %6, %35 : vector<16x512xf32>
    %37 = vector.shape_cast %34 : vector<1x512xf32> to vector<1x512xf32>
    %38 = vector.broadcast %37 : vector<1x512xf32> to vector<16x512xf32>
    %39 = arith.select %36, %38, %33 : vector<16x512xi1>, vector<16x512xf32>
    %c6 = arith.constant 6 : index
    %c0_16 = arith.constant 0 : index
    %40 = vector.load %arg5[%c6, %c0_16] : memref<7x512xf32, #tpu.memory_space<vmem>>, vector<1x512xf32>
    %cst_17 = arith.constant 2.500000e+00 : f32
    %41 = vector.broadcast %cst_17 : f32 to vector<16x512xf32>
    %42 = arith.cmpf ogt, %6, %41 : vector<16x512xf32>
    %43 = vector.shape_cast %40 : vector<1x512xf32> to vector<1x512xf32>
    %44 = vector.broadcast %43 : vector<1x512xf32> to vector<16x512xf32>
    %45 = arith.select %42, %44, %39 : vector<16x512xi1>, vector<16x512xf32>
    %c0_18 = arith.constant 0 : index
    %c0_19 = arith.constant 0 : index
    %c0_20 = arith.constant 0 : index
    %46 = vector.load %arg6[%c0_18, %c0_19, %c0_20] : memref<1x16x512xf32, #tpu.memory_space<vmem>>, vector<1x16x512xf32>
    %47 = vector.shape_cast %46 : vector<1x16x512xf32> to vector<16x512xf32>
    %48 = vector.shape_cast %45 : vector<16x512xf32> to vector<1x16x512xf32>
    tpu.vector_store %arg6[%c0_18, %c0_19, %c0_20], %48 {strides = array<i32>} : memref<1x16x512xf32, #tpu.memory_space<vmem>>, vector<1x16x512xf32>,
    return
  }
  func.func @transform_0(%arg0: i32, %arg1: i32, %arg2: i32) -> (i32, i32, i32) {
    %c0_i32 = arith.constant 0 : i32
    %c0_i32_0 = arith.constant 0 : i32
    return %arg0, %arg1, %c0_i32 : i32, i32, i32
  }
  func.func @transform_1(%arg0: i32, %arg1: i32, %arg2: i32) -> (i32, i32, i32) {
    %c0_i32 = arith.constant 0 : i32
    %c0_i32_0 = arith.constant 0 : i32
    return %arg0, %c0_i32, %arg2 : i32, i32, i32
  }
  func.func @transform_2(%arg0: i32, %arg1: i32, %arg2: i32) -> (i32, i32) {
    %c0_i32 = arith.constant 0 : i32
    %c0_i32_0 = arith.constant 0 : i32
    %c0_i32_1 = arith.constant 0 : i32
    return %c0_i32, %c0_i32_0 : i32, i32
  }
  func.func @transform_3(%arg0: i32, %arg1: i32, %arg2: i32) -> (i32, i32, i32) {
    %c0_i32 = arith.constant 0 : i32
    return %arg0, %arg1, %arg2 : i32, i32, i32
  }
}

</mosaic_0001>

<llo_original>
// kernel: tpu_custom_call.1
$region0: #{tpu_custom_call.1}
  #allocation0 [shape = 'u32[]', space=smem, size = 0x4, offset = 0x4, fixed_abs, tag = 'smem constant byte address 0x4 - core index']
  #allocation1 [shape = 'u32[144,128]{1,0:T(1,128)}', space=vmem, size = 0x12000, scoped, tag = 'internal scratch']
  %s0 = inlined_call_operand.vmem [shape: f32[2,16,1], index: 0, kind: input, shape index: {}]
  %s1 = inlined_call_operand.vmem [shape: f32[2,1,512], index: 1, kind: input, shape index: {}]
  %s2 = inlined_call_operand.vmem [shape: f32[7,512], index: 2, kind: input, shape index: {}]
  %s3 = inlined_call_operand.hbm [shape: f32[2,16,512], index: 3, kind: output, shape index: {}]
  %s4 = sld [smem:[#allocation0]]
  $region45: #{tpu_custom_call.1} parent=0
    _
  %s6 = ssub.s32 1, %s4
  %s7 = scalar_select 0, %s6, %s4
  $region1: #{tpu_custom_call.1} parent=0
    #allocation2 [shape = 'u8[65536]{0}', space=vmem, size = 0x10000, scoped, tag = 'output window, operand 0']
    #allocation3 [shape = 's32[2]{0}', space=sflag, size = 0x8, scoped, tag = 'scoped memory for tpu_custom_call.1']
    %8 = vsyncpa [#allocation3], 0
    %s9 = scalar_lea.sflag [#allocation3], 1
    %10 = vsyncpa %s9, 0
    loop: start=0, step=1, limit=4
    $region2: #{tpu_custom_call.1} parent=1 // loop_pre_header
      _
    $region3: #{tpu_custom_call.1} parent=1 // loop_header
      %s12 = sphi 0, %s16
      %p13 = scmp.ge.s32.totalorder %s12, 4
      %s19 = sphi 0, %s38
      %s20 = sphi 0, %s34
      %s21 = sphi 0, %s30
      %s22 = sphi 0, %s19
      %s23 = sphi 0, %s20
      %s24 = sphi 0, %s21
      %s25 = sphi 0, %s22
      %s26 = sphi 0, %s23
      %s27 = sphi 0, %s24
      %s43 = sphi 0, %s45
      %s46 = sphi 0, %s43
      %s47 = sphi 0, %s46
      %s63 = sphi 0, %s47
      %s71 = sphi 0, %s73
      %s74 = sphi 0, %s71
      %s75 = sphi 0, %s74
      %s91 = sphi 0, %s75
      %s95 = sphi 0, %s95
      %s97 = sphi 0, %s95
      %s98 = sphi 0, %s97
      %s112 = sphi 0, %s98
      %s122 = sphi 0, %s124
      %s125 = sphi 0, %s122
      %s126 = sphi 0, %s125
      %s142 = sphi 0, %s126
    $region4: #{tpu_custom_call.1} parent=1 // loop_header_branch
      %15 = sbr.rel (%p13) target = $region8
    $region5: #{tpu_custom_call.1} parent=1 // loop_body
      %s17 = ssub.s32 %s12, 1
      %s18 = ssub.s32 %s12, 2
      %s28 = sadd.s32 1, %s21
      %p29 = scmp.ge.s32.totalorder %s28, 1
      %s30 = scalar_select %p29, 0, %s28
      %s31 = sadd.s32 1, %s20
      %s32 = scalar_select %p29, %s31, %s20
      %p33 = scmp.ge.s32.totalorder %s32, 1
      %s34 = scalar_select %p33, 0, %s32
      %s35 = sadd.s32 1, %s19
      %s36 = scalar_select %p33, %s35, %s19
      %p37 = scmp.ge.s32.totalorder %s36, 2
      %s38 = scalar_select %p37, 0, %s36
      %s39 = ssub.s32 %s19, %s38
      %s40 = ssub.s32 %s20, %s34
      %s41 = sor.u32 %s39, %s40
      %p42 = scmp.eq.s32.totalorder %s41, 0
      %s44 = sadd.s32 %s43, 1
      %s45 = scalar_select %p42, %s43, %s44
      %p48 = pneg %p42
      %p49 = scmp.eq.s32.totalorder %s12, 1
      %p50 = por %p48, %p49
      %p51 = scmp.ne.s32.totalorder %s43, %s46
      %p52 = scmp.eq.s32.totalorder %s12, 0
      %p53 = por %p51, %p52
      %p54 = scmp.ne.s32.totalorder %s43, %s46
      %p55 = scmp.eq.s32.totalorder %s17, 1
      %p56 = por %p54, %p55
      %p57 = scmp.ne.s32.totalorder %s46, %s47
      %p58 = scmp.eq.s32.totalorder %s17, 0
      %p59 = por %p57, %p58
      %p60 = scmp.ne.s32.totalorder %s46, %s47
      %p61 = scmp.eq.s32.totalorder %s18, 1
      %p62 = por %p60, %p61
      %p64 = scmp.ne.s32.totalorder %s47, %s63
      %p65 = scmp.eq.s32.totalorder %s18, 0
      %p66 = por %p64, %p65
      %s67 = ssub.s32 %s19, %s38
      %s68 = ssub.s32 %s21, %s30
      %s69 = sor.u32 %s67, %s68
      %p70 = scmp.eq.s32.totalorder %s69, 0
      %s72 = sadd.s32 %s71, 1
      %s73 = scalar_select %p70, %s71, %s72
      %p76 = pneg %p70
      %p77 = scmp.eq.s32.totalorder %s12, 1
      %p78 = por %p76, %p77
      %p79 = scmp.ne.s32.totalorder %s71, %s74
      %p80 = scmp.eq.s32.totalorder %s12, 0
      %p81 = por %p79, %p80
      %p82 = scmp.ne.s32.totalorder %s71, %s74
      %p83 = scmp.eq.s32.totalorder %s17, 1
      %p84 = por %p82, %p83
      %p85 = scmp.ne.s32.totalorder %s74, %s75
      %p86 = scmp.eq.s32.totalorder %s17, 0
      %p87 = por %p85, %p86
      %p88 = scmp.ne.s32.totalorder %s74, %s75
      %p89 = scmp.eq.s32.totalorder %s18, 1
      %p90 = por %p88, %p89
      %p92 = scmp.ne.s32.totalorder %s75, %s91
      %p93 = scmp.eq.s32.totalorder %s18, 0
      %p94 = por %p92, %p93
      %s96 = sadd.s32 %s95, 1
      %p99 = scmp.eq.s32.totalorder %s12, 1
      %p100 = scmp.ne.s32.totalorder %s95, %s97
      %p101 = scmp.eq.s32.totalorder %s12, 0
      %p102 = por %p100, %p101
      %p103 = scmp.ne.s32.totalorder %s95, %s97
      %p104 = scmp.eq.s32.totalorder %s17, 1
      %p105 = por %p103, %p104
      %p106 = scmp.ne.s32.totalorder %s97, %s98
      %p107 = scmp.eq.s32.totalorder %s17, 0
      %p108 = por %p106, %p107
      %p109 = scmp.ne.s32.totalorder %s97, %s98
      %p110 = scmp.eq.s32.totalorder %s18, 1
      %p111 = por %p109, %p110
      %p113 = scmp.ne.s32.totalorder %s98, %s112
      %p114 = scmp.eq.s32.totalorder %s18, 0
      %p115 = por %p113, %p114
      %s116 = ssub.s32 %s19, %s38
      %s117 = ssub.s32 %s20, %s34
      %s118 = sor.u32 %s116, %s117
      %s119 = ssub.s32 %s21, %s30
      %s120 = sor.u32 %s118, %s119
      %p121 = scmp.eq.s32.totalorder %s120, 0
      %s123 = sadd.s32 %s122, 1
      %s124 = scalar_select %p121, %s122, %s123
      %p127 = pneg %p121
      %p128 = scmp.eq.s32.totalorder %s12, 1
      %p129 = por %p127, %p128
      %p130 = scmp.ne.s32.totalorder %s122, %s125
      %p131 = scmp.eq.s32.totalorder %s12, 0
      %p132 = por %p130, %p131
      %p133 = scmp.ne.s32.totalorder %s122, %s125
      %p134 = scmp.eq.s32.totalorder %s17, 1
      %p135 = por %p133, %p134
      %p136 = scmp.ne.s32.totalorder %s125, %s126
      %p137 = scmp.eq.s32.totalorder %s17, 0
      %p138 = por %p136, %p137
      %p139 = scmp.ne.s32.totalorder %s125, %s126
      %p140 = scmp.eq.s32.totalorder %s18, 1
      %p141 = por %p139, %p140
      %p143 = scmp.ne.s32.totalorder %s126, %s142
      %p144 = scmp.eq.s32.totalorder %s18, 0
      %p145 = por %p143, %p144
      %p146 = scmp.le.s32.totalorder 1, %s12
      %p147 = scmp.lt.s32.totalorder %s12, 3
      %p148 = pnand %p146, %p147
      %p149 = pneg %p148
      // Predicated region
      $region9: #{tpu_custom_call.1} parent=5 // pred_check
        _
      $region10: #{tpu_custom_call.1} parent=5 // pred_check_branch
        %151 = sbr.rel (%p148) target = $region12
      $region11: #{tpu_custom_call.1} parent=5 // pred_region
        %s152 = ssub.s32 %s12, 1
        // Predicated region
        $region13: #{tpu_custom_call.1} parent=11 // pred_check
          %p153 = pneg %p108
        $region14: #{tpu_custom_call.1} parent=11 // pred_check_branch
          %155 = sbr.rel (%p153) target = $region16
        $region15: #{tpu_custom_call.1} parent=11 // pred_region
          _
        $region16: #{tpu_custom_call.1} parent=11 // pred_fallthru
          _
      $region12: #{tpu_custom_call.1} parent=5 // pred_fallthru
        _
      %p156 = scmp.lt.s32.totalorder %s12, 2
      // Predicated region
      $region17: #{tpu_custom_call.1} parent=5 // pred_check
        %p157 = pneg %p156
      $region18: #{tpu_custom_call.1} parent=5 // pred_check_branch
        %159 = sbr.rel (%p157) target = $region20
      $region19: #{tpu_custom_call.1} parent=5 // pred_region
        // Predicated region
        $region21: #{tpu_custom_call.1} parent=19 // pred_check
          %p160 = pneg %p53
        $region22: #{tpu_custom_call.1} parent=19 // pred_check_branch
          %162 = sbr.rel (%p160) target = $region24
        $region23: #{tpu_custom_call.1} parent=19 // pred_region
          %s163 = smul.u32 2, %s20
          %p164 = scmp.lt.s32.totalorder %s19, 1
          %s165 = scalar_select %p164, %s19, 1
          %p166 = scmp.lt.s32.totalorder %s163, 1
          %s167 = scalar_select %p166, %s163, 1
          %s168 = smul.addr %s165, 2
          %s169 = sadd.s32 %s167, %s168
          %s170 = smul.addr %s169, 8
          %s171 = scalar_lea.vmem %s0, %s170
          %s172 = smul.u32 2, %s20
        $region24: #{tpu_custom_call.1} parent=19 // pred_fallthru
          _
        // Predicated region
        $region25: #{tpu_custom_call.1} parent=19 // pred_check
          %p173 = pneg %p81
        $region26: #{tpu_custom_call.1} parent=19 // pred_check_branch
          %175 = sbr.rel (%p173) target = $region28
        $region27: #{tpu_custom_call.1} parent=19 // pred_region
          %s176 = smul.u32 4, %s21
          %p177 = scmp.lt.s32.totalorder %s19, 1
          %s178 = scalar_select %p177, %s19, 1
          %p179 = scmp.lt.s32.totalorder %s176, 3
          %s180 = scalar_select %p179, %s176, 3
          %s181 = smul.addr %s178, 4
          %s182 = sadd.s32 %s180, %s181
          %s183 = scalar_lea.vmem %s1, %s182
          %s184 = smul.u32 4, %s21
        $region28: #{tpu_custom_call.1} parent=19 // pred_fallthru
          _
      $region20: #{tpu_custom_call.1} parent=5 // pred_fallthru
        _
      %p185 = scmp.le.s32.totalorder 1, %s12
      %p186 = scmp.lt.s32.totalorder %s12, 3
      %p187 = pnand %p185, %p186
      %p188 = pneg %p187
      // Predicated region
      $region29: #{tpu_custom_call.1} parent=5 // pred_check
        _
      $region30: #{tpu_custom_call.1} parent=5 // pred_check_branch
        %190 = sbr.rel (%p187) target = $region32
      $region31: #{tpu_custom_call.1} parent=5 // pred_region
        %s191 = ssub.s32 %s12, 1
        %s192 = smul.u32 2, %s23
        %p193 = scmp.lt.s32.totalorder %s22, 1
        %s194 = scalar_select %p193, %s22, 1
        %p195 = scmp.lt.s32.totalorder %s192, 1
        %s196 = scalar_select %p195, %s192, 1
        %s197 = smul.addr %s194, 2
        %s198 = sadd.s32 %s196, %s197
        %s199 = smul.addr %s198, 8
        %s200 = scalar_lea.vmem %s0, %s199
        %p201 = pneg %p59
        %p202 = pneg %p56
        %s203 = smul.u32 4, %s24
        %p204 = scmp.lt.s32.totalorder %s22, 1
        %s205 = scalar_select %p204, %s22, 1
        %p206 = scmp.lt.s32.totalorder %s203, 3
        %s207 = scalar_select %p206, %s203, 3
        %s208 = smul.addr %s205, 4
        %s209 = sadd.s32 %s207, %s208
        %s210 = scalar_lea.vmem %s1, %s209
        %p211 = pneg %p87
        %p212 = pneg %p84
        %p213 = pneg %p108
        %p214 = pneg %p105
        %p215 = pneg %p138
        %p216 = pneg %p135
        %s217 = sand.u32 %s125, 1
        %s218 = scalar_lea.sflag [#allocation3], %s217
        %s219 = sand.u32 %s125, 1
        %s220 = smul.addr %s219, 64
        %s221 = scalar_lea.vmem [#allocation2], %s220
        %s222 = smul.u32 2, %s23
        %p223 = scmp.lt.s32.totalorder %s22, 1
        %s224 = scalar_select %p223, %s22, 1
        %p225 = scmp.lt.s32.totalorder %s222, 1
        %s226 = scalar_select %p225, %s222, 1
        %s227 = smul.addr %s224, 2
        %s228 = sadd.s32 %s226, %s227
        %s229 = smul.addr %s228, 8
        %s230 = scalar_lea.vmem %s0, %s229
        %s231 = smul.u32 2, %s23
        %s232 = smul.u32 4, %s24
        %p233 = scmp.lt.s32.totalorder %s22, 1
        %s234 = scalar_select %p233, %s22, 1
        %p235 = scmp.lt.s32.totalorder %s232, 3
        %s236 = scalar_select %p235, %s232, 3
        %s237 = smul.addr %s234, 4
        %s238 = sadd.s32 %s236, %s237
        %s239 = scalar_lea.vmem %s1, %s238
        %s240 = smul.u32 4, %s24
        %s241 = smul.u32 2, %s23
        %s242 = smul.u32 4, %s24
        %v243 = vld [vmem:[%s230] sm:$0xff]
        %v244 = vld [vmem:[%s230 + $0x8] sm:$0xff]
        %v245 = vld [vmem:[%s239] sm:$0xf]
        %247 = vset.pattern.permute.xlu0 0
        %248 = vperm.xlu0 %247, %v243
        %v249 = vpop.permute.xlu0 %248
        %252 = vset.pattern.permute.xlu0 0
        %253 = vperm.xlu0 %252, %v244
        %v254 = vpop.permute.xlu0 %253
        %v257 = vlaneseq
        %v258 = vshrl.u32 %v257, 7
        %v259 = vsub.s32 0, %v258
        %v260 = vrot.slane %v245, %v259
        %v261 = vlaneseq
        %v262 = vshrl.u32 %v261, 7
        %v263 = vsub.s32 1, %v262
        %v264 = vrot.slane %v245, %v263
        %v265 = vlaneseq
        %v266 = vshrl.u32 %v265, 7
        %v267 = vsub.s32 2, %v266
        %v268 = vrot.slane %v245, %v267
        %v269 = vlaneseq
        %v270 = vshrl.u32 %v269, 7
        %v271 = vsub.s32 3, %v270
        %v272 = vrot.slane %v245, %v271
        %v277 = vsub.f32 %v249, %v260
        %v278 = vsub.f32 %v249, %v264
        %v279 = vsub.f32 %v249, %v268
        %v280 = vsub.f32 %v249, %v272
        %v281 = vsub.f32 %v254, %v260
        %v282 = vsub.f32 %v254, %v264
        %v283 = vsub.f32 %v254, %v268
        %v284 = vsub.f32 %v254, %v272
        %v285 = vld [vmem:[%s2] ss:$8 sm:$0xf]
        %v287 = vlaneseq
        %v288 = vshrl.u32 %v287, 7
        %v289 = vsub.s32 0, %v288
        %v290 = vrot.slane %v285, %v289
        %v291 = vlaneseq
        %v292 = vshrl.u32 %v291, 7
        %v293 = vsub.s32 1, %v292
        %v294 = vrot.slane %v285, %v293
        %v295 = vlaneseq
        %v296 = vshrl.u32 %v295, 7
        %v297 = vsub.s32 2, %v296
        %v298 = vrot.slane %v285, %v297
        %v299 = vlaneseq
        %v300 = vshrl.u32 %v299, 7
        %v301 = vsub.s32 3, %v300
        %v302 = vrot.slane %v285, %v301
        %s307 = scalar_lea.vmem %s2, 1
        %v308 = vld [vmem:[%s307] ss:$8 sm:$0xf]
        %vm309 = vcmp.gt.f32.partialorder %v277, -2.5
        %vm310 = vcmp.gt.f32.partialorder %v278, -2.5
        %vm311 = vcmp.gt.f32.partialorder %v279, -2.5
        %vm312 = vcmp.gt.f32.partialorder %v280, -2.5
        %vm313 = vcmp.gt.f32.partialorder %v281, -2.5
        %vm314 = vcmp.gt.f32.partialorder %v282, -2.5
        %vm315 = vcmp.gt.f32.partialorder %v283, -2.5
        %vm316 = vcmp.gt.f32.partialorder %v284, -2.5
        %v318 = vlaneseq
        %v319 = vshrl.u32 %v318, 7
        %v320 = vsub.s32 0, %v319
        %v321 = vrot.slane %v308, %v320
        %v322 = vlaneseq
        %v323 = vshrl.u32 %v322, 7
        %v324 = vsub.s32 1, %v323
        %v325 = vrot.slane %v308, %v324
        %v326 = vlaneseq
        %v327 = vshrl.u32 %v326, 7
        %v328 = vsub.s32 2, %v327
        %v329 = vrot.slane %v308, %v328
        %v330 = vlaneseq
        %v331 = vshrl.u32 %v330, 7
        %v332 = vsub.s32 3, %v331
        %v333 = vrot.slane %v308, %v332
        %v338 = vsel %vm309, %v321, %v290
        %v339 = vsel %vm310, %v325, %v294
        %v340 = vsel %vm311, %v329, %v298
        %v341 = vsel %vm312, %v333, %v302
        %v342 = vsel %vm313, %v321, %v290
        %v343 = vsel %vm314, %v325, %v294
        %v344 = vsel %vm315, %v329, %v298
        %v345 = vsel %vm316, %v333, %v302
        %s346 = scalar_lea.vmem %s2, 2
        %v347 = vld [vmem:[%s346] ss:$8 sm:$0xf]
        %vm348 = vcmp.gt.f32.partialorder %v277, -1.5
        %vm349 = vcmp.gt.f32.partialorder %v278, -1.5
        %vm350 = vcmp.gt.f32.partialorder %v279, -1.5
        %vm351 = vcmp.gt.f32.partialorder %v280, -1.5
        %vm352 = vcmp.gt.f32.partialorder %v281, -1.5
        %vm353 = vcmp.gt.f32.partialorder %v282, -1.5
        %vm354 = vcmp.gt.f32.partialorder %v283, -1.5
        %vm355 = vcmp.gt.f32.partialorder %v284, -1.5
        %v357 = vlaneseq
        %v358 = vshrl.u32 %v357, 7
        %v359 = vsub.s32 0, %v358
        %v360 = vrot.slane %v347, %v359
        %v361 = vlaneseq
        %v362 = vshrl.u32 %v361, 7
        %v363 = vsub.s32 1, %v362
        %v364 = vrot.slane %v347, %v363
        %v365 = vlaneseq
        %v366 = vshrl.u32 %v365, 7
        %v367 = vsub.s32 2, %v366
        %v368 = vrot.slane %v347, %v367
        %v369 = vlaneseq
        %v370 = vshrl.u32 %v369, 7
        %v371 = vsub.s32 3, %v370
        %v372 = vrot.slane %v347, %v371
        %v377 = vsel %vm348, %v360, %v338
        %v378 = vsel %vm349, %v364, %v339
        %v379 = vsel %vm350, %v368, %v340
        %v380 = vsel %vm351, %v372, %v341
        %v381 = vsel %vm352, %v360, %v342
        %v382 = vsel %vm353, %v364, %v343
        %v383 = vsel %vm354, %v368, %v344
        %v384 = vsel %vm355, %v372, %v345
        %s385 = scalar_lea.vmem %s2, 3
        %v386 = vld [vmem:[%s385] ss:$8 sm:$0xf]
        %vm387 = vcmp.gt.f32.partialorder %v277, -0.5
        %vm388 = vcmp.gt.f32.partialorder %v278, -0.5
        %vm389 = vcmp.gt.f32.partialorder %v279, -0.5
        %vm390 = vcmp.gt.f32.partialorder %v280, -0.5
        %vm391 = vcmp.gt.f32.partialorder %v281, -0.5
        %vm392 = vcmp.gt.f32.partialorder %v282, -0.5
        %vm393 = vcmp.gt.f32.partialorder %v283, -0.5
        %vm394 = vcmp.gt.f32.partialorder %v284, -0.5
        %v396 = vlaneseq
        %v397 = vshrl.u32 %v396, 7
        %v398 = vsub.s32 0, %v397
        %v399 = vrot.slane %v386, %v398
        %v400 = vlaneseq
        %v401 = vshrl.u32 %v400, 7
        %v402 = vsub.s32 1, %v401
        %v403 = vrot.slane %v386, %v402
        %v404 = vlaneseq
        %v405 = vshrl.u32 %v404, 7
        %v406 = vsub.s32 2, %v405
        %v407 = vrot.slane %v386, %v406
        %v408 = vlaneseq
        %v409 = vshrl.u32 %v408, 7
        %v410 = vsub.s32 3, %v409
        %v411 = vrot.slane %v386, %v410
        %v416 = vsel %vm387, %v399, %v377
        %v417 = vsel %vm388, %v403, %v378
        %v418 = vsel %vm389, %v407, %v379
        %v419 = vsel %vm390, %v411, %v380
        %v420 = vsel %vm391, %v399, %v381
        %v421 = vsel %vm392, %v403, %v382
        %v422 = vsel %vm393, %v407, %v383
        %v423 = vsel %vm394, %v411, %v384
        %s424 = scalar_lea.vmem %s2, 4
        %v425 = vld [vmem:[%s424] ss:$8 sm:$0xf]
        %vm426 = vcmp.gt.f32.partialorder %v277, 0.5
        %vm427 = vcmp.gt.f32.partialorder %v278, 0.5
        %vm428 = vcmp.gt.f32.partialorder %v279, 0.5
        %vm429 = vcmp.gt.f32.partialorder %v280, 0.5
        %vm430 = vcmp.gt.f32.partialorder %v281, 0.5
        %vm431 = vcmp.gt.f32.partialorder %v282, 0.5
        %vm432 = vcmp.gt.f32.partialorder %v283, 0.5
        %vm433 = vcmp.gt.f32.partialorder %v284, 0.5
        %v435 = vlaneseq
        %v436 = vshrl.u32 %v435, 7
        %v437 = vsub.s32 0, %v436
        %v438 = vrot.slane %v425, %v437
        %v439 = vlaneseq
        %v440 = vshrl.u32 %v439, 7
        %v441 = vsub.s32 1, %v440
        %v442 = vrot.slane %v425, %v441
        %v443 = vlaneseq
        %v444 = vshrl.u32 %v443, 7
        %v445 = vsub.s32 2, %v444
        %v446 = vrot.slane %v425, %v445
        %v447 = vlaneseq
        %v448 = vshrl.u32 %v447, 7
        %v449 = vsub.s32 3, %v448
        %v450 = vrot.slane %v425, %v449
        %v455 = vsel %vm426, %v438, %v416
        %v456 = vsel %vm427, %v442, %v417
        %v457 = vsel %vm428, %v446, %v418
        %v458 = vsel %vm429, %v450, %v419
        %v459 = vsel %vm430, %v438, %v420
        %v460 = vsel %vm431, %v442, %v421
        %v461 = vsel %vm432, %v446, %v422
        %v462 = vsel %vm433, %v450, %v423
        %s463 = scalar_lea.vmem %s2, 5
        %v464 = vld [vmem:[%s463] ss:$8 sm:$0xf]
        %vm465 = vcmp.gt.f32.partialorder %v277, 1.5
        %vm466 = vcmp.gt.f32.partialorder %v278, 1.5
        %vm467 = vcmp.gt.f32.partialorder %v279, 1.5
        %vm468 = vcmp.gt.f32.partialorder %v280, 1.5
        %vm469 = vcmp.gt.f32.partialorder %v281, 1.5
        %vm470 = vcmp.gt.f32.partialorder %v282, 1.5
        %vm471 = vcmp.gt.f32.partialorder %v283, 1.5
        %vm472 = vcmp.gt.f32.partialorder %v284, 1.5
        %v474 = vlaneseq
        %v475 = vshrl.u32 %v474, 7
        %v476 = vsub.s32 0, %v475
        %v477 = vrot.slane %v464, %v476
        %v478 = vlaneseq
        %v479 = vshrl.u32 %v478, 7
        %v480 = vsub.s32 1, %v479
        %v481 = vrot.slane %v464, %v480
        %v482 = vlaneseq
        %v483 = vshrl.u32 %v482, 7
        %v484 = vsub.s32 2, %v483
        %v485 = vrot.slane %v464, %v484
        %v486 = vlaneseq
        %v487 = vshrl.u32 %v486, 7
        %v488 = vsub.s32 3, %v487
        %v489 = vrot.slane %v464, %v488
        %v494 = vsel %vm465, %v477, %v455
        %v495 = vsel %vm466, %v481, %v456
        %v496 = vsel %vm467, %v485, %v457
        %v497 = vsel %vm468, %v489, %v458
        %v498 = vsel %vm469, %v477, %v459
        %v499 = vsel %vm470, %v481, %v460
        %v500 = vsel %vm471, %v485, %v461
        %v501 = vsel %vm472, %v489, %v462
        %s502 = scalar_lea.vmem %s2, 6
        %v503 = vld [vmem:[%s502] ss:$8 sm:$0xf]
        %vm504 = vcmp.gt.f32.partialorder %v277, 2.5
        %vm505 = vcmp.gt.f32.partialorder %v278, 2.5
        %vm506 = vcmp.gt.f32.partialorder %v279, 2.5
        %vm507 = vcmp.gt.f32.partialorder %v280, 2.5
        %vm508 = vcmp.gt.f32.partialorder %v281, 2.5
        %vm509 = vcmp.gt.f32.partialorder %v282, 2.5
        %vm510 = vcmp.gt.f32.partialorder %v283, 2.5
        %vm511 = vcmp.gt.f32.partialorder %v284, 2.5
        %v513 = vlaneseq
        %v514 = vshrl.u32 %v513, 7
        %v515 = vsub.s32 0, %v514
        %v516 = vrot.slane %v503, %v515
        %v517 = vlaneseq
        %v518 = vshrl.u32 %v517, 7
        %v519 = vsub.s32 1, %v518
        %v520 = vrot.slane %v503, %v519
        %v521 = vlaneseq
        %v522 = vshrl.u32 %v521, 7
        %v523 = vsub.s32 2, %v522
        %v524 = vrot.slane %v503, %v523
        %v525 = vlaneseq
        %v526 = vshrl.u32 %v525, 7
        %v527 = vsub.s32 3, %v526
        %v528 = vrot.slane %v503, %v527
        %v533 = vsel %vm504, %v516, %v494
        %v534 = vsel %vm505, %v520, %v495
        %v535 = vsel %vm506, %v524, %v496
        %v536 = vsel %vm507, %v528, %v497
        %v537 = vsel %vm508, %v516, %v498
        %v538 = vsel %vm509, %v520, %v499
        %v539 = vsel %vm510, %v524, %v500
        %v540 = vsel %vm511, %v528, %v501
        %541 = vst [vmem:[%s221] sm:$0xff] %v533
        %542 = vst [vmem:[%s221 + $0x8] sm:$0xff] %v534
        %543 = vst [vmem:[%s221 + $0x10] sm:$0xff] %v535
        %544 = vst [vmem:[%s221 + $0x18] sm:$0xff] %v536
        %545 = vst [vmem:[%s221 + $0x20] sm:$0xff] %v537
        %546 = vst [vmem:[%s221 + $0x28] sm:$0xff] %v538
        %547 = vst [vmem:[%s221 + $0x30] sm:$0xff] %v539
        %548 = vst [vmem:[%s221 + $0x38] sm:$0xff] %v540
        %s549 = sand.u32 %s125, 1
        %s550 = scalar_lea.sflag [#allocation3], %s549
        %s551 = sand.u32 %s125, 1
        %s552 = smul.addr %s551, 64
        %s553 = scalar_lea.vmem [#allocation2], %s552
        // Predicated region
        $region33: #{tpu_custom_call.1} parent=31 // pred_check
          %p554 = pneg %p135
        $region34: #{tpu_custom_call.1} parent=31 // pred_check_branch
          %556 = sbr.rel (%p554) target = $region36
        $region35: #{tpu_custom_call.1} parent=31 // pred_region
          %s557 = smul.u32 2, %s23
          %s558 = smul.u32 4, %s24
          %s560 = ssub.s32 1024, 1024
          %561 = vsyncadd %s550, %s560
          %s562 = smul.addr %s557, 4
          %s563 = sadd.s32 %s558, %s562
          %s564 = smul.addr %s22, 8
          %s565 = sadd.s32 %s563, %s564
          %s566 = smul.addr %s565, 128
          %s567 = scalar_lea.hbm %s3, %s566
          %s568 = sshll.u32 %s553, 4
          %s569 = int_to_ptr.vmem [resolvable:$true] %s568
          %574 = dma.vmem_to_hbm [thread:$0]  %s569, 1024, %s567, %s550, 512, 512, 32
        $region36: #{tpu_custom_call.1} parent=31 // pred_fallthru
          _
      $region32: #{tpu_custom_call.1} parent=5 // pred_fallthru
        _
      %p575 = scmp.le.s32.totalorder 2, %s12
      // Predicated region
      $region37: #{tpu_custom_call.1} parent=5 // pred_check
        %p576 = pneg %p575
      $region38: #{tpu_custom_call.1} parent=5 // pred_check_branch
        %578 = sbr.rel (%p576) target = $region40
      $region39: #{tpu_custom_call.1} parent=5 // pred_region
        %s579 = ssub.s32 %s12, 2
        // Predicated region
        $region41: #{tpu_custom_call.1} parent=39 // pred_check
          %p580 = pneg %p141
        $region42: #{tpu_custom_call.1} parent=39 // pred_check_branch
          %582 = sbr.rel (%p580) target = $region44
        $region43: #{tpu_custom_call.1} parent=39 // pred_region
          %s583 = sand.u32 %s126, 1
          %s584 = scalar_lea.sflag [#allocation3], %s583
          %s585 = sand.u32 %s126, 1
          %s586 = smul.addr %s585, 64
          %s587 = scalar_lea.vmem [#allocation2], %s586
          %588 = dma.done %s584, 1024
        $region44: #{tpu_custom_call.1} parent=39 // pred_fallthru
          _
      $region40: #{tpu_custom_call.1} parent=5 // pred_fallthru
        _
    $region6: #{tpu_custom_call.1} parent=1 // loop_footer
      %s16 = sadd.s32 1, %s12
    $region7: #{tpu_custom_call.1} parent=1 // loop_footer_branch
      %11 = sbr.rel target = $region3
    $region8: #{tpu_custom_call.1} parent=1 // loop_exit
      _
    %589 = vsyncpa [#allocation3], 1
    %s590 = scalar_lea.sflag [#allocation3], 1
    %591 = vsyncpa %s590, 1

</llo_original>
